<compile_context>
chip_gen: v6e
topology: v6e:2x2x1
jax: 0.10.0
libtpu: 0.0.40
codegen_flags: <defaults>
</compile_context>

<pallas_src>
import functools

import jax
import jax.numpy as jnp
from jax import lax
from jax.experimental import pallas as pl
from jax.experimental.pallas import tpu as pltpu


# Tables at or below this size take the resident-VMEM fast path.
_SMALL_TABLE_BYTES = 2 * 1024 * 1024


def _resident_table_kernel(ids_ref, emb_ref, pos_ref, out_ref, *, vocab):
    """Small-vocab path: table resident in VMEM, gather via one-hot MXU matmul.

    ids_ref : (tile_s, 1) int32 token ids for this tile (VMEM block)
    emb_ref : (V, E) embedding table (constant block index -> fetched once)
    pos_ref : (tile_s, E) positional tile (resident across the inner batch axis)
    out_ref : (1, tile_s, E) output tile
    """
    tile_s = ids_ref.shape[0]
    ids = ids_ref[...]                                            # (tile_s, 1)
    iota = lax.broadcasted_iota(jnp.int32, (tile_s, vocab), 1)    # (tile_s, V)
    onehot = (ids == iota).astype(emb_ref.dtype)
    gathered = jnp.dot(onehot, emb_ref[...], preferred_element_type=jnp.float32)
    out_ref[0] = (gathered + pos_ref[...].astype(jnp.float32)).astype(out_ref.dtype)


def _hbm_gather_kernel(ids_ref, emb_hbm, pos_ref, out_ref, gbuf, sem, *,
                       seq_len, tile_s, n_b, n_steps):
    """Large-vocab path: per-row HBM gather, double-buffered across grid steps.

    ids_ref : (B*S,) int32 in SMEM (scalar prefetch)
    emb_hbm : (V, E) embedding table left in HBM (manual DMA row gather)
    pos_ref : (tile_s, E) positional tile (resident across the inner batch axis)
    out_ref : (1, tile_s, E) output tile
    gbuf    : (2, tile_s, E) VMEM double buffer for gathered rows
    sem     : (2,) DMA semaphores, one per slot (single byte-count wait)
    """
    st = pl.program_id(0)
    b = pl.program_id(1)
    step = st * n_b + b
    slot = step % 2

    def issue_tile(step_idx, slot_idx):
        # Which (seq-tile, batch) does this flat step correspond to?
        st2 = step_idx // n_b
        b2 = step_idx % n_b
        base = b2 * seq_len + st2 * tile_s

        def body(t, carry):
            row = ids_ref[base + t]                  # SMEM id read (before any wait)
            pltpu.make_async_copy(
                emb_hbm.at[pl.ds(row, 1)],           # (1, E) row of the HBM table
                gbuf.at[slot_idx, pl.ds(t, 1)],      # (1, E) slot in the VMEM buffer
                sem.at[slot_idx],
            ).start()
            return carry

        lax.fori_loop(0, tile_s, body, 0, unroll=8)

    # Prime the pipeline on the very first grid step.
    @pl.when(step == 0)
    def _():
        issue_tile(step, slot)

    # Prefetch the next tile's rows before waiting on the current ones.
    @pl.when(step + 1 < n_steps)
    def _():
        issue_tile(step + 1, (step + 1) % 2)

    # Single byte-count wait covering all tile_s row copies landing in this slot.
    pltpu.make_async_copy(gbuf.at[slot], gbuf.at[slot], sem.at[slot]).wait()

    out_ref[0] = (gbuf[slot].astype(jnp.float32)
                  + pos_ref[...].astype(jnp.float32)).astype(out_ref.dtype)


def onehot_embedder(x_ids, emb_table, pos_table, start_position_id=0, *,
                    tile_s=128, force_hbm_gather=False):
    """Pallas-backed equivalent of OneHotEmbedder.forward(x_ids, start_position_id)."""
    B, S = x_ids.shape
    V, E = emb_table.shape
    # start_position_id must be a static Python int (mirrors the PyTorch assert).
    assert start_position_id + S <= pos_table.shape[0]

    tile_s = min(tile_s, S)
    assert S % tile_s == 0, "seq length must be divisible by the token tile"
    n_st = S // tile_s
    grid = (n_st, B)            # seq-tiles outer, batch inner -> pos tile resident

    out_dtype = emb_table.dtype
    pos_slice = pos_table[start_position_id:start_position_id + S]   # static slice

    # Lane-dense stores: pad the embedding dim to a multiple of 128 if needed.
    E_pad = ((E + 127) // 128) * 128
    if E_pad != E:
        emb_table = jnp.pad(emb_table, ((0, 0), (0, E_pad - E)))
        pos_slice = jnp.pad(pos_slice, ((0, 0), (0, E_pad - E)))

    # Clamp out-of-range ids (PyTorch raises; an unchecked HBM row DMA would not).
    ids = jnp.clip(x_ids.astype(jnp.int32), 0, V - 1)

    table_bytes = V * E_pad * emb_table.dtype.itemsize

    if table_bytes <= _SMALL_TABLE_BYTES and not force_hbm_gather:
        # Fast path: table resident in VMEM, one-hot MXU gather per tile.
        ids_col = ids.reshape(B * S, 1)
        kernel = functools.partial(_resident_table_kernel, vocab=V)
        out = pl.pallas_call(
            kernel,
            out_shape=jax.ShapeDtypeStruct((B, S, E_pad), out_dtype),
            grid=grid,
            in_specs=[
                pl.BlockSpec((tile_s, 1), lambda st, b: (b * n_st + st, 0)),
                pl.BlockSpec((V, E_pad), lambda st, b: (0, 0)),        # resident table
                pl.BlockSpec((tile_s, E_pad), lambda st, b: (st, 0)),  # resident across b
            ],
            out_specs=pl.BlockSpec((1, tile_s, E_pad), lambda st, b: (b, st, 0)),
            compiler_params=pltpu.CompilerParams(
                dimension_semantics=("parallel", "parallel")),
        )(ids_col, emb_table, pos_slice)
    else:
        # Large-vocab path: scalar-prefetched ids + double-buffered HBM row gather.
        ids_flat = ids.reshape(-1)
        kernel = functools.partial(
            _hbm_gather_kernel, seq_len=S, tile_s=tile_s, n_b=B, n_steps=n_st * B)
        out = pl.pallas_call(
            kernel,
            out_shape=jax.ShapeDtypeStruct((B, S, E_pad), out_dtype),
            grid_spec=pltpu.PrefetchScalarGridSpec(
                num_scalar_prefetch=1,                                 # ids -> SMEM
                grid=grid,
                in_specs=[
                    pl.BlockSpec(memory_space=pl.ANY),                 # table stays in HBM
                    pl.BlockSpec((tile_s, E_pad), lambda st, b, ids: (st, 0)),
                ],
                out_specs=pl.BlockSpec((1, tile_s, E_pad),
                                       lambda st, b, ids: (b, st, 0)),
                scratch_shapes=[
                    pltpu.VMEM((2, tile_s, E_pad), emb_table.dtype),   # double-buffered rows
                    pltpu.SemaphoreType.DMA((2,)),                     # one sem per slot
                ],
            ),
            compiler_params=pltpu.CompilerParams(
                # Cross-step prefetch chain through scratch -> keep the grid sequential.
                dimension_semantics=("arbitrary", "arbitrary")),
        )(ids_flat, emb_table, pos_slice)

    if E_pad != E:
        out = out[..., :E]
    return out


if __name__ == "__main__":
    # Small, deterministic configuration (mirrors OneHotConfig fields).
    VOC_DIM = 512          # config.voc_dim
    EMB_DIM = 128          # config.emb_dim  (lane-dense output)
    MAX_LEN = 384          # config.max_len  (has_positional_emb=True, learned)
    PAD_IDX = 1            # specials = ('<unk>', '<pad>') -> pad index 1
    B, S = 2, 256
    START = 4              # exercise a non-zero start_position_id

    key = jax.random.PRNGKey(0)
    k_emb, k_pos, k_ids = jax.random.split(key, 3)

    # reinit_embedding_-style uniform init; padding_idx row is zeroed
    # (torch.nn.Embedding(padding_idx=...) keeps that row at zero).
    bound = (3.0 / EMB_DIM) ** 0.5
    emb_table = jax.random.uniform(
        k_emb, (VOC_DIM, EMB_DIM), jnp.float32, -bound, bound)
    emb_table = emb_table.at[PAD_IDX].set(0.0)
    pos_table = jax.random.uniform(
        k_pos, (MAX_LEN, EMB_DIM), jnp.float32, -bound, bound)

    # Token ids, including some pad tokens.
    x_ids = jax.random.randint(k_ids, (B, S), 0, VOC_DIM, dtype=jnp.int32)
    x_ids = x_ids.at[0, -2:].set(PAD_IDX)

    # Pure-JAX reference of the PyTorch forward.
    ref = emb_table[x_ids] + pos_table[START:START + S][None, :, :]

    # Fast path (small vocab -> resident VMEM table + one-hot MXU gather).
    out_fast = jax.block_until_ready(
        onehot_embedder(x_ids, emb_table, pos_table, START))
    assert out_fast.shape == (B, S, EMB_DIM)
    assert jnp.allclose(out_fast, ref, atol=1e-5, rtol=1e-5), "fast path mismatch"

    # Large-vocab path (forced): double-buffered HBM row gather.
    out_gather = jax.block_until_ready(
        onehot_embedder(x_ids, emb_table, pos_table, START, force_hbm_gather=True))
    assert out_gather.shape == (B, S, EMB_DIM)
    assert jnp.allclose(out_gather, ref, atol=1e-5, rtol=1e-5), "gather path mismatch"

    print("KERNEL_OK")
</pallas_src>

<mosaic_0001>
module attributes {stable_mosaic.version = 11 : i64} {
  func.func @_resident_table_kernel(%arg0: i32, %arg1: i32, %arg2: memref<128x1xi32, #tpu.memory_space<vmem>>, %arg3: memref<512x128xf32, #tpu.memory_space<vmem>>, %arg4: memref<128x128xf32, #tpu.memory_space<vmem>>, %arg5: memref<1x128x128xf32, #tpu.memory_space<vmem>>) attributes {dimension_semantics = [#tpu.dimension_semantics<parallel>, #tpu.dimension_semantics<parallel>], iteration_bounds = array<i64: 2, 2>, scalar_prefetch = 0 : i64, scratch_operands = 0 : i64, tpu.core_type = #tpu.core_type<tc>, window_params = [{transform_indices = @transform_0, window_bounds = array<i64: 128, 1>}, {pipeline_mode = #tpu.pipeline_mode<synchronous>, transform_indices = @transform_1, window_bounds = array<i64: 512, 128>}, {transform_indices = @transform_2, window_bounds = array<i64: 128, 128>}, {transform_indices = @transform_3, window_bounds = array<i64: 1, 128, 128>}]} {
    %c0 = arith.constant 0 : index
    %c0_0 = arith.constant 0 : index
    %0 = vector.load %arg2[%c0, %c0_0] : memref<128x1xi32, #tpu.memory_space<vmem>>, vector<128x1xi32>
    %1 = tpu.iota {dimensions = array<i32: 1>} : vector<128x512xi32>
    %2 = vector.broadcast %0 : vector<128x1xi32> to vector<128x512xi32>
    %3 = arith.cmpi eq, %2, %1 : vector<128x512xi32>
    %4 = arith.extui %3 : vector<128x512xi1> to vector<128x512xi32>
    %5 = arith.sitofp %4 : vector<128x512xi32> to vector<128x512xf32>
    %c0_1 = arith.constant 0 : index
    %c0_2 = arith.constant 0 : index
    %6 = vector.load %arg3[%c0_1, %c0_2] : memref<512x128xf32, #tpu.memory_space<vmem>>, vector<512x128xf32>
    %cst = arith.constant dense<0.000000e+00> : vector<128x128xf32>
    %7 = tpu.matmul %5, %6, %cst {dimension_numbers = #tpu.dot_dimension_numbers<[1], [0], [0], [1], [0, 0, 1, 1], [], []>} : vector<128x512xf32>, vector<512x128xf32>, vector<128x128xf32> -> vector<128x128xf32>
    %c0_3 = arith.constant 0 : index
    %c0_4 = arith.constant 0 : index
    %8 = vector.load %arg4[%c0_3, %c0_4] : memref<128x128xf32, #tpu.memory_space<vmem>>, vector<128x128xf32>
    %9 = arith.addf %7, %8 : vector<128x128xf32>
    %c0_5 = arith.constant 0 : index
    %c0_6 = arith.constant 0 : index
    %c0_7 = arith.constant 0 : index
    %10 = vector.load %arg5[%c0_5, %c0_6, %c0_7] : memref<1x128x128xf32, #tpu.memory_space<vmem>>, vector<1x128x128xf32>
    %11 = vector.shape_cast %10 : vector<1x128x128xf32> to vector<128x128xf32>
    %12 = vector.shape_cast %9 : vector<128x128xf32> to vector<1x128x128xf32>
    tpu.vector_store %arg5[%c0_5, %c0_6, %c0_7], %12 {strides = array<i32>} : memref<1x128x128xf32, #tpu.memory_space<vmem>>, vector<1x128x128xf32>,
    return
  }
  func.func @transform_0(%arg0: i32, %arg1: i32) -> (i32, i32) {
    %c2_i32 = arith.constant 2 : i32
    %0 = arith.muli %arg1, %c2_i32 : i32
    %1 = arith.addi %0, %arg0 : i32
    %c0_i32 = arith.constant 0 : i32
    %c0_i32_0 = arith.constant 0 : i32
    return %1, %c0_i32 : i32, i32
  }
  func.func @transform_1(%arg0: i32, %arg1: i32) -> (i32, i32) {
    %c0_i32 = arith.constant 0 : i32
    %c0_i32_0 = arith.constant 0 : i32
    %c0_i32_1 = arith.constant 0 : i32
    return %c0_i32, %c0_i32_0 : i32, i32
  }
  func.func @transform_2(%arg0: i32, %arg1: i32) -> (i32, i32) {
    %c0_i32 = arith.constant 0 : i32
    %c0_i32_0 = arith.constant 0 : i32
    return %arg0, %c0_i32 : i32, i32
  }
  func.func @transform_3(%arg0: i32, %arg1: i32) -> (i32, i32, i32) {
    %c0_i32 = arith.constant 0 : i32
    %c0_i32_0 = arith.constant 0 : i32
    return %arg1, %arg0, %c0_i32 : i32, i32, i32
  }
}

</mosaic_0001>

<llo_original>
// kernel: tpu_custom_call.1
$region0: #{tpu_custom_call.1}
  #allocation0 [shape = 'u32[]', space=smem, size = 0x4, offset = 0x4, fixed_abs, tag = 'smem constant byte address 0x4 - core index']
  #allocation1 [shape = 'u32[144,128]{1,0:T(1,128)}', space=vmem, size = 0x12000, scoped, tag = 'internal scratch']
  %s0 = inlined_call_operand.vmem [shape: s32[512,1], index: 0, kind: input, shape index: {}]
  %s1 = inlined_call_operand.vmem [shape: f32[512,128], index: 1, kind: input, shape index: {}]
  %s2 = inlined_call_operand.hbm [shape: f32[256,128], index: 2, kind: input, shape index: {}]
  %s3 = inlined_call_operand.hbm [shape: f32[2,256,128], index: 3, kind: output, shape index: {}]
  %s4 = sld [smem:[#allocation0]]
  $region49: #{tpu_custom_call.1} parent=0
    _
  %s6 = ssub.s32 1, %s4
  %s7 = scalar_select 0, %s6, %s4
  $region1: #{tpu_custom_call.1} parent=0
    #allocation2 [shape = 'u8[131072]{0}', space=vmem, size = 0x20000, scoped, tag = 'input window, operand 2']
    #allocation3 [shape = 's32[2]{0}', space=sflag, size = 0x8, scoped, tag = 'scoped memory for tpu_custom_call.1']
    #allocation4 [shape = 's32[2]{0}', space=sflag, size = 0x8, scoped, tag = 'scoped memory for tpu_custom_call.1']
    #allocation5 [shape = 'u8[131072]{0}', space=vmem, size = 0x20000, scoped, tag = 'output window, operand 0']
    %8 = vsyncpa [#allocation3], 0
    %s9 = scalar_lea.sflag [#allocation3], 1
    %10 = vsyncpa %s9, 0
    %11 = vsyncpa [#allocation4], 0
    %s12 = scalar_lea.sflag [#allocation4], 1
    %13 = vsyncpa %s12, 0
    loop: start=0, step=1, limit=6
    $region2: #{tpu_custom_call.1} parent=1 // loop_pre_header
      _
    $region3: #{tpu_custom_call.1} parent=1 // loop_header
      %s15 = sphi 0, %s19
      %p16 = scmp.ge.s32.totalorder %s15, 6
      %s22 = sphi 0, %s34
      %s23 = sphi 0, %s30
      %s24 = sphi 0, %s22
      %s25 = sphi 0, %s23
      %s26 = sphi 0, %s24
      %s27 = sphi 0, %s25
      %s41 = sphi 0, %s43
      %s44 = sphi 0, %s41
      %s45 = sphi 0, %s44
      %s61 = sphi 0, %s45
      %s65 = sphi 0, %s65
      %s67 = sphi 0, %s65
      %s68 = sphi 0, %s67
      %s82 = sphi 0, %s68
      %s88 = sphi 0, %s90
      %s91 = sphi 0, %s88
      %s92 = sphi 0, %s91
      %s108 = sphi 0, %s92
      %s116 = sphi 0, %s118
      %s119 = sphi 0, %s116
      %s120 = sphi 0, %s119
      %s136 = sphi 0, %s120
    $region4: #{tpu_custom_call.1} parent=1 // loop_header_branch
      %18 = sbr.rel (%p16) target = $region8
    $region5: #{tpu_custom_call.1} parent=1 // loop_body
      %s20 = ssub.s32 %s15, 1
      %s21 = ssub.s32 %s15, 2
      %s28 = sadd.s32 1, %s23
      %p29 = scmp.ge.s32.totalorder %s28, 2
      %s30 = scalar_select %p29, 0, %s28
      %s31 = sadd.s32 1, %s22
      %s32 = scalar_select %p29, %s31, %s22
      %p33 = scmp.ge.s32.totalorder %s32, 2
      %s34 = scalar_select %p33, 0, %s32
      %s35 = smul.u32 %s23, 2
      %s36 = sadd.s32 %s35, %s22
      %s37 = smul.u32 %s30, 2
      %s38 = sadd.s32 %s37, %s34
      %s39 = ssub.s32 %s36, %s38
      %p40 = scmp.eq.s32.totalorder %s39, 0
      %s42 = sadd.s32 %s41, 1
      %s43 = scalar_select %p40, %s41, %s42
      %p46 = pneg %p40
      %p47 = scmp.eq.s32.totalorder %s15, 3
      %p48 = por %p46, %p47
      %p49 = scmp.ne.s32.totalorder %s41, %s44
      %p50 = scmp.eq.s32.totalorder %s15, 0
      %p51 = por %p49, %p50
      %p52 = scmp.ne.s32.totalorder %s41, %s44
      %p53 = scmp.eq.s32.totalorder %s20, 3
      %p54 = por %p52, %p53
      %p55 = scmp.ne.s32.totalorder %s44, %s45
      %p56 = scmp.eq.s32.totalorder %s20, 0
      %p57 = por %p55, %p56
      %p58 = scmp.ne.s32.totalorder %s44, %s45
      %p59 = scmp.eq.s32.totalorder %s21, 3
      %p60 = por %p58, %p59
      %p62 = scmp.ne.s32.totalorder %s45, %s61
      %p63 = scmp.eq.s32.totalorder %s21, 0
      %p64 = por %p62, %p63
      %s66 = sadd.s32 %s65, 1
      %p69 = scmp.eq.s32.totalorder %s15, 3
      %p70 = scmp.ne.s32.totalorder %s65, %s67
      %p71 = scmp.eq.s32.totalorder %s15, 0
      %p72 = por %p70, %p71
      %p73 = scmp.ne.s32.totalorder %s65, %s67
      %p74 = scmp.eq.s32.totalorder %s20, 3
      %p75 = por %p73, %p74
      %p76 = scmp.ne.s32.totalorder %s67, %s68
      %p77 = scmp.eq.s32.totalorder %s20, 0
      %p78 = por %p76, %p77
      %p79 = scmp.ne.s32.totalorder %s67, %s68
      %p80 = scmp.eq.s32.totalorder %s21, 3
      %p81 = por %p79, %p80
      %p83 = scmp.ne.s32.totalorder %s68, %s82
      %p84 = scmp.eq.s32.totalorder %s21, 0
      %p85 = por %p83, %p84
      %s86 = ssub.s32 %s22, %s34
      %p87 = scmp.eq.s32.totalorder %s86, 0
      %s89 = sadd.s32 %s88, 1
      %s90 = scalar_select %p87, %s88, %s89
      %p93 = pneg %p87
      %p94 = scmp.eq.s32.totalorder %s15, 3
      %p95 = por %p93, %p94
      %p96 = scmp.ne.s32.totalorder %s88, %s91
      %p97 = scmp.eq.s32.totalorder %s15, 0
      %p98 = por %p96, %p97
      %p99 = scmp.ne.s32.totalorder %s88, %s91
      %p100 = scmp.eq.s32.totalorder %s20, 3
      %p101 = por %p99, %p100
      %p102 = scmp.ne.s32.totalorder %s91, %s92
      %p103 = scmp.eq.s32.totalorder %s20, 0
      %p104 = por %p102, %p103
      %p105 = scmp.ne.s32.totalorder %s91, %s92
      %p106 = scmp.eq.s32.totalorder %s21, 3
      %p107 = por %p105, %p106
      %p109 = scmp.ne.s32.totalorder %s92, %s108
      %p110 = scmp.eq.s32.totalorder %s21, 0
      %p111 = por %p109, %p110
      %s112 = ssub.s32 %s23, %s30
      %s113 = ssub.s32 %s22, %s34
      %s114 = sor.u32 %s112, %s113
      %p115 = scmp.eq.s32.totalorder %s114, 0
      %s117 = sadd.s32 %s116, 1
      %s118 = scalar_select %p115, %s116, %s117
      %p121 = pneg %p115
      %p122 = scmp.eq.s32.totalorder %s15, 3
      %p123 = por %p121, %p122
      %p124 = scmp.ne.s32.totalorder %s116, %s119
      %p125 = scmp.eq.s32.totalorder %s15, 0
      %p126 = por %p124, %p125
      %p127 = scmp.ne.s32.totalorder %s116, %s119
      %p128 = scmp.eq.s32.totalorder %s20, 3
      %p129 = por %p127, %p128
      %p130 = scmp.ne.s32.totalorder %s119, %s120
      %p131 = scmp.eq.s32.totalorder %s20, 0
      %p132 = por %p130, %p131
      %p133 = scmp.ne.s32.totalorder %s119, %s120
      %p134 = scmp.eq.s32.totalorder %s21, 3
      %p135 = por %p133, %p134
      %p137 = scmp.ne.s32.totalorder %s120, %s136
      %p138 = scmp.eq.s32.totalorder %s21, 0
      %p139 = por %p137, %p138
      %p140 = scmp.le.s32.totalorder 1, %s15
      %p141 = scmp.lt.s32.totalorder %s15, 5
      %p142 = pnand %p140, %p141
      %p143 = pneg %p142
      // Predicated region
      $region9: #{tpu_custom_call.1} parent=5 // pred_check
        _
      $region10: #{tpu_custom_call.1} parent=5 // pred_check_branch
        %145 = sbr.rel (%p142) target = $region12
      $region11: #{tpu_custom_call.1} parent=5 // pred_region
        %s146 = ssub.s32 %s15, 1
        // Predicated region
        $region13: #{tpu_custom_call.1} parent=11 // pred_check
          %p147 = pneg %p78
        $region14: #{tpu_custom_call.1} parent=11 // pred_check_branch
          %149 = sbr.rel (%p147) target = $region16
        $region15: #{tpu_custom_call.1} parent=11 // pred_region
          _
        $region16: #{tpu_custom_call.1} parent=11 // pred_fallthru
          _
      $region12: #{tpu_custom_call.1} parent=5 // pred_fallthru
        _
      %p150 = scmp.lt.s32.totalorder %s15, 4
      // Predicated region
      $region17: #{tpu_custom_call.1} parent=5 // pred_check
        %p151 = pneg %p150
      $region18: #{tpu_custom_call.1} parent=5 // pred_check_branch
        %153 = sbr.rel (%p151) target = $region20
      $region19: #{tpu_custom_call.1} parent=5 // pred_region
        // Predicated region
        $region21: #{tpu_custom_call.1} parent=19 // pred_check
          %p154 = pneg %p51
        $region22: #{tpu_custom_call.1} parent=19 // pred_check_branch
          %156 = sbr.rel (%p154) target = $region24
        $region23: #{tpu_custom_call.1} parent=19 // pred_region
          %s157 = smul.u32 %s23, 2
          %s158 = sadd.s32 %s157, %s22
          %s159 = smul.u32 16, %s158
          %p160 = scmp.lt.s32.totalorder %s159, 63
          %s161 = scalar_select %p160, %s159, 63
          %s162 = smul.addr %s161, 8
          %s163 = scalar_lea.vmem %s0, %s162
          %s164 = smul.u32 %s23, 2
          %s165 = sadd.s32 %s164, %s22
          %s166 = smul.u32 16, %s165
        $region24: #{tpu_custom_call.1} parent=19 // pred_fallthru
          _
        // Predicated region
        $region25: #{tpu_custom_call.1} parent=19 // pred_check
          %p167 = pneg %p98
        $region26: #{tpu_custom_call.1} parent=19 // pred_check_branch
          %169 = sbr.rel (%p167) target = $region28
        $region27: #{tpu_custom_call.1} parent=19 // pred_region
          %s170 = sand.u32 %s88, 1
          %s171 = scalar_lea.sflag [#allocation3], %s170
          %s172 = sand.u32 %s88, 1
          %s173 = smul.addr %s172, 128
          %s174 = scalar_lea.vmem [#allocation2], %s173
          %s175 = smul.u32 16, %s22
          %s177 = ssub.s32 2048, 2048
          %178 = vsyncadd %s171, %s177
          %s179 = smul.addr %s175, 128
          %s180 = scalar_lea.hbm %s2, %s179
          %s181 = sshll.u32 %s174, 4
          %s182 = int_to_ptr.vmem [resolvable:$true] %s181
          %187 = dma.hbm_to_vmem [thread:$0]  %s180, 2048, %s182, %s171, 128, 128, 8
        $region28: #{tpu_custom_call.1} parent=19 // pred_fallthru
          _
      $region20: #{tpu_custom_call.1} parent=5 // pred_fallthru
        _
      %p188 = scmp.le.s32.totalorder 1, %s15
      %p189 = scmp.lt.s32.totalorder %s15, 5
      %p190 = pnand %p188, %p189
      %p191 = pneg %p190
      // Predicated region
      $region29: #{tpu_custom_call.1} parent=5 // pred_check
        _
      $region30: #{tpu_custom_call.1} parent=5 // pred_check_branch
        %193 = sbr.rel (%p190) target = $region32
      $region31: #{tpu_custom_call.1} parent=5 // pred_region
        %s194 = ssub.s32 %s15, 1
        %s195 = sand.u32 %s91, 1
        %s196 = scalar_lea.sflag [#allocation3], %s195
        %s197 = sand.u32 %s91, 1
        %s198 = smul.addr %s197, 128
        %s199 = scalar_lea.vmem [#allocation2], %s198
        // Predicated region
        $region33: #{tpu_custom_call.1} parent=31 // pred_check
          %p200 = pneg %p104
        $region34: #{tpu_custom_call.1} parent=31 // pred_check_branch
          %202 = sbr.rel (%p200) target = $region36
        $region35: #{tpu_custom_call.1} parent=31 // pred_region
          %203 = dma.done %s196, 2048
        $region36: #{tpu_custom_call.1} parent=31 // pred_fallthru
          _
        %s204 = smul.u32 %s25, 2
        %s205 = sadd.s32 %s204, %s24
        %s206 = smul.u32 16, %s205
        %p207 = scmp.lt.s32.totalorder %s206, 63
        %s208 = scalar_select %p207, %s206, 63
        %s209 = smul.addr %s208, 8
        %s210 = scalar_lea.vmem %s0, %s209
        %p211 = pneg %p57
        %p212 = pneg %p54
        %p213 = pneg %p78
        %p214 = pneg %p75
        %s215 = sand.u32 %s91, 1
        %s216 = scalar_lea.sflag [#allocation3], %s215
        %s217 = sand.u32 %s91, 1
        %s218 = smul.addr %s217, 128
        %s219 = scalar_lea.vmem [#allocation2], %s218
        %p220 = pneg %p104
        %p221 = pneg %p101
        %p222 = pneg %p132
        %p223 = pneg %p129
        %s224 = sand.u32 %s119, 1
        %s225 = scalar_lea.sflag [#allocation4], %s224
        %s226 = sand.u32 %s119, 1
        %s227 = smul.addr %s226, 128
        %s228 = scalar_lea.vmem [#allocation5], %s227
        %s229 = smul.u32 %s25, 2
        %s230 = sadd.s32 %s229, %s24
        %s231 = smul.u32 16, %s230
        %p232 = scmp.lt.s32.totalorder %s231, 63
        %s233 = scalar_select %p232, %s231, 63
        %s234 = smul.addr %s233, 8
        %s235 = scalar_lea.vmem %s0, %s234
        %s236 = smul.u32 %s25, 2
        %s237 = sadd.s32 %s236, %s24
        %s238 = smul.u32 16, %s237
        %s239 = smul.u32 16, %s24
        %s240 = smul.u32 16, %s24
        %v241 = vld [vmem:[%s235] sm:$0xff]
        %v242 = vld [vmem:[%s235 + $0x8] sm:$0xff]
        %v243 = vld [vmem:[%s235 + $0x10] sm:$0xff]
        %v244 = vld [vmem:[%s235 + $0x18] sm:$0xff]
        %v245 = vld [vmem:[%s235 + $0x20] sm:$0xff]
        %v246 = vld [vmem:[%s235 + $0x28] sm:$0xff]
        %v247 = vld [vmem:[%s235 + $0x30] sm:$0xff]
        %v248 = vld [vmem:[%s235 + $0x38] sm:$0xff]
        %v249 = vld [vmem:[%s235 + $0x40] sm:$0xff]
        %v250 = vld [vmem:[%s235 + $0x48] sm:$0xff]
        %v251 = vld [vmem:[%s235 + $0x50] sm:$0xff]
        %v252 = vld [vmem:[%s235 + $0x58] sm:$0xff]
        %v253 = vld [vmem:[%s235 + $0x60] sm:$0xff]
        %v254 = vld [vmem:[%s235 + $0x68] sm:$0xff]
        %v255 = vld [vmem:[%s235 + $0x70] sm:$0xff]
        %v256 = vld [vmem:[%s235 + $0x78] sm:$0xff]
        %v257 = vlaneseq
        %v258 = vand.u32 %v257, 127
        %v259 = vadd.s32 %v258, 128
        %v260 = vadd.s32 %v258, 256
        %v261 = vadd.s32 %v258, 384
        %262 = vset.pattern.permute.xlu0 0
        %263 = vperm.xlu0 %262, %v241
        %v264 = vpop.permute.xlu0 %263
        %265 = vset.pattern.permute.xlu0 0
        %266 = vperm.xlu0 %265, %v242
        %v267 = vpop.permute.xlu0 %266
        %268 = vset.pattern.permute.xlu0 0
        %269 = vperm.xlu0 %268, %v243
        %v270 = vpop.permute.xlu0 %269
        %271 = vset.pattern.permute.xlu0 0
        %272 = vperm.xlu0 %271, %v244
        %v273 = vpop.permute.xlu0 %272
        %274 = vset.pattern.permute.xlu0 0
        %275 = vperm.xlu0 %274, %v245
        %v276 = vpop.permute.xlu0 %275
        %277 = vset.pattern.permute.xlu0 0
        %278 = vperm.xlu0 %277, %v246
        %v279 = vpop.permute.xlu0 %278
        %280 = vset.pattern.permute.xlu0 0
        %281 = vperm.xlu0 %280, %v247
        %v282 = vpop.permute.xlu0 %281
        %283 = vset.pattern.permute.xlu0 0
        %284 = vperm.xlu0 %283, %v248
        %v285 = vpop.permute.xlu0 %284
        %286 = vset.pattern.permute.xlu0 0
        %287 = vperm.xlu0 %286, %v249
        %v288 = vpop.permute.xlu0 %287
        %289 = vset.pattern.permute.xlu0 0
        %290 = vperm.xlu0 %289, %v250
        %v291 = vpop.permute.xlu0 %290
        %292 = vset.pattern.permute.xlu0 0
        %293 = vperm.xlu0 %292, %v251
        %v294 = vpop.permute.xlu0 %293
        %295 = vset.pattern.permute.xlu0 0
        %296 = vperm.xlu0 %295, %v252
        %v297 = vpop.permute.xlu0 %296
        %298 = vset.pattern.permute.xlu0 0
        %299 = vperm.xlu0 %298, %v253
        %v300 = vpop.permute.xlu0 %299
        %301 = vset.pattern.permute.xlu0 0
        %302 = vperm.xlu0 %301, %v254
        %v303 = vpop.permute.xlu0 %302
        %304 = vset.pattern.permute.xlu0 0
        %305 = vperm.xlu0 %304, %v255
        %v306 = vpop.permute.xlu0 %305
        %307 = vset.pattern.permute.xlu0 0
        %308 = vperm.xlu0 %307, %v256
        %v309 = vpop.permute.xlu0 %308
        %vm310 = vcmp.eq.s32.totalorder %v264, %v258
        %vm311 = vcmp.eq.s32.totalorder %v264, %v259
        %vm312 = vcmp.eq.s32.totalorder %v264, %v260
        %vm313 = vcmp.eq.s32.totalorder %v264, %v261
        %vm314 = vcmp.eq.s32.totalorder %v267, %v258
        %vm315 = vcmp.eq.s32.totalorder %v267, %v259
        %vm316 = vcmp.eq.s32.totalorder %v267, %v260
        %vm317 = vcmp.eq.s32.totalorder %v267, %v261
        %vm318 = vcmp.eq.s32.totalorder %v270, %v258
        %vm319 = vcmp.eq.s32.totalorder %v270, %v259
        %vm320 = vcmp.eq.s32.totalorder %v270, %v260
        %vm321 = vcmp.eq.s32.totalorder %v270, %v261
        %vm322 = vcmp.eq.s32.totalorder %v273, %v258
        %vm323 = vcmp.eq.s32.totalorder %v273, %v259
        %vm324 = vcmp.eq.s32.totalorder %v273, %v260
        %vm325 = vcmp.eq.s32.totalorder %v273, %v261
        %vm326 = vcmp.eq.s32.totalorder %v276, %v258
        %vm327 = vcmp.eq.s32.totalorder %v276, %v259
        %vm328 = vcmp.eq.s32.totalorder %v276, %v260
        %vm329 = vcmp.eq.s32.totalorder %v276, %v261
        %vm330 = vcmp.eq.s32.totalorder %v279, %v258
        %vm331 = vcmp.eq.s32.totalorder %v279, %v259
        %vm332 = vcmp.eq.s32.totalorder %v279, %v260
        %vm333 = vcmp.eq.s32.totalorder %v279, %v261
        %vm334 = vcmp.eq.s32.totalorder %v282, %v258
        %vm335 = vcmp.eq.s32.totalorder %v282, %v259
        %vm336 = vcmp.eq.s32.totalorder %v282, %v260
        %vm337 = vcmp.eq.s32.totalorder %v282, %v261
        %vm338 = vcmp.eq.s32.totalorder %v285, %v258
        %vm339 = vcmp.eq.s32.totalorder %v285, %v259
        %vm340 = vcmp.eq.s32.totalorder %v285, %v260
        %vm341 = vcmp.eq.s32.totalorder %v285, %v261
        %vm342 = vcmp.eq.s32.totalorder %v288, %v258
        %vm343 = vcmp.eq.s32.totalorder %v288, %v259
        %vm344 = vcmp.eq.s32.totalorder %v288, %v260
        %vm345 = vcmp.eq.s32.totalorder %v288, %v261
        %vm346 = vcmp.eq.s32.totalorder %v291, %v258
        %vm347 = vcmp.eq.s32.totalorder %v291, %v259
        %vm348 = vcmp.eq.s32.totalorder %v291, %v260
        %vm349 = vcmp.eq.s32.totalorder %v291, %v261
        %vm350 = vcmp.eq.s32.totalorder %v294, %v258
        %vm351 = vcmp.eq.s32.totalorder %v294, %v259
        %vm352 = vcmp.eq.s32.totalorder %v294, %v260
        %vm353 = vcmp.eq.s32.totalorder %v294, %v261
        %vm354 = vcmp.eq.s32.totalorder %v297, %v258
        %vm355 = vcmp.eq.s32.totalorder %v297, %v259
        %vm356 = vcmp.eq.s32.totalorder %v297, %v260
        %vm357 = vcmp.eq.s32.totalorder %v297, %v261
        %vm358 = vcmp.eq.s32.totalorder %v300, %v258
        %vm359 = vcmp.eq.s32.totalorder %v300, %v259
        %vm360 = vcmp.eq.s32.totalorder %v300, %v260
        %vm361 = vcmp.eq.s32.totalorder %v300, %v261
        %vm362 = vcmp.eq.s32.totalorder %v303, %v258
        %vm363 = vcmp.eq.s32.totalorder %v303, %v259
        %vm364 = vcmp.eq.s32.totalorder %v303, %v260
        %vm365 = vcmp.eq.s32.totalorder %v303, %v261
        %vm366 = vcmp.eq.s32.totalorder %v306, %v258
        %vm367 = vcmp.eq.s32.totalorder %v306, %v259
        %vm368 = vcmp.eq.s32.totalorder %v306, %v260
        %vm369 = vcmp.eq.s32.totalorder %v306, %v261
        %vm370 = vcmp.eq.s32.totalorder %v309, %v258
        %vm371 = vcmp.eq.s32.totalorder %v309, %v259
        %vm372 = vcmp.eq.s32.totalorder %v309, %v260
        %vm373 = vcmp.eq.s32.totalorder %v309, %v261
        %v374 = vsel %vm310, 1, 0
        %v375 = vsel %vm311, 1, 0
        %v376 = vsel %vm312, 1, 0
        %v377 = vsel %vm313, 1, 0
        %v378 = vsel %vm314, 1, 0
        %v379 = vsel %vm315, 1, 0
        %v380 = vsel %vm316, 1, 0
        %v381 = vsel %vm317, 1, 0
        %v382 = vsel %vm318, 1, 0
        %v383 = vsel %vm319, 1, 0
        %v384 = vsel %vm320, 1, 0
        %v385 = vsel %vm321, 1, 0
        %v386 = vsel %vm322, 1, 0
        %v387 = vsel %vm323, 1, 0
        %v388 = vsel %vm324, 1, 0
        %v389 = vsel %vm325, 1, 0
        %v390 = vsel %vm326, 1, 0
        %v391 = vsel %vm327, 1, 0
        %v392 = vsel %vm328, 1, 0
        %v393 = vsel %vm329, 1, 0
        %v394 = vsel %vm330, 1, 0
        %v395 = vsel %vm331, 1, 0
        %v396 = vsel %vm332, 1, 0
        %v397 = vsel %vm333, 1, 0
        %v398 = vsel %vm334, 1, 0
        %v399 = vsel %vm335, 1, 0
        %v400 = vsel %vm336, 1, 0
        %v401 = vsel %vm337, 1, 0
        %v402 = vsel %vm338, 1, 0
        %v403 = vsel %vm339, 1, 0
        %v404 = vsel %vm340, 1, 0
        %v405 = vsel %vm341, 1, 0
        %v406 = vsel %vm342, 1, 0
        %v407 = vsel %vm343, 1, 0
        %v408 = vsel %vm344, 1, 0
        %v409 = vsel %vm345, 1, 0
        %v410 = vsel %vm346, 1, 0
        %v411 = vsel %vm347, 1, 0
        %v412 = vsel %vm348, 1, 0
        %v413 = vsel %vm349, 1, 0
        %v414 = vsel %vm350, 1, 0
        %v415 = vsel %vm351, 1, 0
        %v416 = vsel %vm352, 1, 0
        %v417 = vsel %vm353, 1, 0
        %v418 = vsel %vm354, 1, 0
        %v419 = vsel %vm355, 1, 0
        %v420 = vsel %vm356, 1, 0
        %v421 = vsel %vm357, 1, 0
        %v422 = vsel %vm358, 1, 0
        %v423 = vsel %vm359, 1, 0
        %v424 = vsel %vm360, 1, 0
        %v425 = vsel %vm361, 1, 0
        %v426 = vsel %vm362, 1, 0
        %v427 = vsel %vm363, 1, 0
        %v428 = vsel %vm364, 1, 0
        %v429 = vsel %vm365, 1, 0
        %v430 = vsel %vm366, 1, 0
        %v431 = vsel %vm367, 1, 0
        %v432 = vsel %vm368, 1, 0
        %v433 = vsel %vm369, 1, 0
        %v434 = vsel %vm370, 1, 0
        %v435 = vsel %vm371, 1, 0
        %v436 = vsel %vm372, 1, 0
        %v437 = vsel %vm373, 1, 0
        %v438 = vcvt.s32.f32 %v374
        %v439 = vcvt.s32.f32 %v375
        %v440 = vcvt.s32.f32 %v376
        %v441 = vcvt.s32.f32 %v377
        %v442 = vcvt.s32.f32 %v378
        %v443 = vcvt.s32.f32 %v379
        %v444 = vcvt.s32.f32 %v380
        %v445 = vcvt.s32.f32 %v381
        %v446 = vcvt.s32.f32 %v382
        %v447 = vcvt.s32.f32 %v383
        %v448 = vcvt.s32.f32 %v384
        %v449 = vcvt.s32.f32 %v385
        %v450 = vcvt.s32.f32 %v386
        %v451 = vcvt.s32.f32 %v387
        %v452 = vcvt.s32.f32 %v388
        %v453 = vcvt.s32.f32 %v389
        %v454 = vcvt.s32.f32 %v390
        %v455 = vcvt.s32.f32 %v391
        %v456 = vcvt.s32.f32 %v392
        %v457 = vcvt.s32.f32 %v393
        %v458 = vcvt.s32.f32 %v394
        %v459 = vcvt.s32.f32 %v395
        %v460 = vcvt.s32.f32 %v396
        %v461 = vcvt.s32.f32 %v397
        %v462 = vcvt.s32.f32 %v398
        %v463 = vcvt.s32.f32 %v399
        %v464 = vcvt.s32.f32 %v400
        %v465 = vcvt.s32.f32 %v401
        %v466 = vcvt.s32.f32 %v402
        %v467 = vcvt.s32.f32 %v403
        %v468 = vcvt.s32.f32 %v404
        %v469 = vcvt.s32.f32 %v405
        %v470 = vcvt.s32.f32 %v406
        %v471 = vcvt.s32.f32 %v407
        %v472 = vcvt.s32.f32 %v408
        %v473 = vcvt.s32.f32 %v409
        %v474 = vcvt.s32.f32 %v410
        %v475 = vcvt.s32.f32 %v411
        %v476 = vcvt.s32.f32 %v412
        %v477 = vcvt.s32.f32 %v413
        %v478 = vcvt.s32.f32 %v414
        %v479 = vcvt.s32.f32 %v415
        %v480 = vcvt.s32.f32 %v416
        %v481 = vcvt.s32.f32 %v417
        %v482 = vcvt.s32.f32 %v418
        %v483 = vcvt.s32.f32 %v419
        %v484 = vcvt.s32.f32 %v420
        %v485 = vcvt.s32.f32 %v421
        %v486 = vcvt.s32.f32 %v422
        %v487 = vcvt.s32.f32 %v423
        %v488 = vcvt.s32.f32 %v424
        %v489 = vcvt.s32.f32 %v425
        %v490 = vcvt.s32.f32 %v426
        %v491 = vcvt.s32.f32 %v427
        %v492 = vcvt.s32.f32 %v428
        %v493 = vcvt.s32.f32 %v429
        %v494 = vcvt.s32.f32 %v430
        %v495 = vcvt.s32.f32 %v431
        %v496 = vcvt.s32.f32 %v432
        %v497 = vcvt.s32.f32 %v433
        %v498 = vcvt.s32.f32 %v434
        %v499 = vcvt.s32.f32 %v435
        %v500 = vcvt.s32.f32 %v436
        %v501 = vcvt.s32.f32 %v437
        %v502 = vld [vmem:[%s1] sm:$0xff]
        %v503 = vld [vmem:[%s1 + $0x8] sm:$0xff]
        %v504 = vld [vmem:[%s1 + $0x10] sm:$0xff]
        %v505 = vld [vmem:[%s1 + $0x18] sm:$0xff]
        %v506 = vld [vmem:[%s1 + $0x20] sm:$0xff]
        %v507 = vld [vmem:[%s1 + $0x28] sm:$0xff]
        %v508 = vld [vmem:[%s1 + $0x30] sm:$0xff]
        %v509 = vld [vmem:[%s1 + $0x38] sm:$0xff]
        %v510 = vld [vmem:[%s1 + $0x40] sm:$0xff]
        %v511 = vld [vmem:[%s1 + $0x48] sm:$0xff]
        %v512 = vld [vmem:[%s1 + $0x50] sm:$0xff]
        %v513 = vld [vmem:[%s1 + $0x58] sm:$0xff]
        %v514 = vld [vmem:[%s1 + $0x60] sm:$0xff]
        %v515 = vld [vmem:[%s1 + $0x68] sm:$0xff]
        %v516 = vld [vmem:[%s1 + $0x70] sm:$0xff]
        %v517 = vld [vmem:[%s1 + $0x78] sm:$0xff]
        %v518 = vld [vmem:[%s1 + $0x80] sm:$0xff]
        %v519 = vld [vmem:[%s1 + $0x88] sm:$0xff]
        %v520 = vld [vmem:[%s1 + $0x90] sm:$0xff]
        %v521 = vld [vmem:[%s1 + $0x98] sm:$0xff]
        %v522 = vld [vmem:[%s1 + $0xa0] sm:$0xff]
        %v523 = vld [vmem:[%s1 + $0xa8] sm:$0xff]
        %v524 = vld [vmem:[%s1 + $0xb0] sm:$0xff]
        %v525 = vld [vmem:[%s1 + $0xb8] sm:$0xff]
        %v526 = vld [vmem:[%s1 + $0xc0] sm:$0xff]
        %v527 = vld [vmem:[%s1 + $0xc8] sm:$0xff]
        %v528 = vld [vmem:[%s1 + $0xd0] sm:$0xff]
        %v529 = vld [vmem:[%s1 + $0xd8] sm:$0xff]
        %v530 = vld [vmem:[%s1 + $0xe0] sm:$0xff]
        %v531 = vld [vmem:[%s1 + $0xe8] sm:$0xff]
        %v532 = vld [vmem:[%s1 + $0xf0] sm:$0xff]
        %v533 = vld [vmem:[%s1 + $0xf8] sm:$0xff]
        %v534 = vld [vmem:[%s1 + $0x100] sm:$0xff]
        %v535 = vld [vmem:[%s1 + $0x108] sm:$0xff]
        %v536 = vld [vmem:[%s1 + $0x110] sm:$0xff]
        %v537 = vld [vmem:[%s1 + $0x118] sm:$0xff]
        %v538 = vld [vmem:[%s1 + $0x120] sm:$0xff]
        %v539 = vld [vmem:[%s1 + $0x128] sm:$0xff]
        %v540 = vld [vmem:[%s1 + $0x130] sm:$0xff]
        %v541 = vld [vmem:[%s1 + $0x138] sm:$0xff]
        %v542 = vld [vmem:[%s1 + $0x140] sm:$0xff]
        %v543 = vld [vmem:[%s1 + $0x148] sm:$0xff]
        %v544 = vld [vmem:[%s1 + $0x150] sm:$0xff]
        %v545 = vld [vmem:[%s1 + $0x158] sm:$0xff]
        %v546 = vld [vmem:[%s1 + $0x160] sm:$0xff]
        %v547 = vld [vmem:[%s1 + $0x168] sm:$0xff]
        %v548 = vld [vmem:[%s1 + $0x170] sm:$0xff]
        %v549 = vld [vmem:[%s1 + $0x178] sm:$0xff]
        %v550 = vld [vmem:[%s1 + $0x180] sm:$0xff]
        %v551 = vld [vmem:[%s1 + $0x188] sm:$0xff]
        %v552 = vld [vmem:[%s1 + $0x190] sm:$0xff]
        %v553 = vld [vmem:[%s1 + $0x198] sm:$0xff]
        %v554 = vld [vmem:[%s1 + $0x1a0] sm:$0xff]
        %v555 = vld [vmem:[%s1 + $0x1a8] sm:$0xff]
        %v556 = vld [vmem:[%s1 + $0x1b0] sm:$0xff]
        %v557 = vld [vmem:[%s1 + $0x1b8] sm:$0xff]
        %v558 = vld [vmem:[%s1 + $0x1c0] sm:$0xff]
        %v559 = vld [vmem:[%s1 + $0x1c8] sm:$0xff]
        %v560 = vld [vmem:[%s1 + $0x1d0] sm:$0xff]
        %v561 = vld [vmem:[%s1 + $0x1d8] sm:$0xff]
        %v562 = vld [vmem:[%s1 + $0x1e0] sm:$0xff]
        %v563 = vld [vmem:[%s1 + $0x1e8] sm:$0xff]
        %v564 = vld [vmem:[%s1 + $0x1f0] sm:$0xff]
        %v565 = vld [vmem:[%s1 + $0x1f8] sm:$0xff]
        %v566 = vld [vmem:[%s199] sm:$0xff]
        %v567 = vld [vmem:[%s199 + $0x8] sm:$0xff]
        %v568 = vld [vmem:[%s199 + $0x10] sm:$0xff]
        %v569 = vld [vmem:[%s199 + $0x18] sm:$0xff]
        %v570 = vld [vmem:[%s199 + $0x20] sm:$0xff]
        %v571 = vld [vmem:[%s199 + $0x28] sm:$0xff]
        %v572 = vld [vmem:[%s199 + $0x30] sm:$0xff]
        %v573 = vld [vmem:[%s199 + $0x38] sm:$0xff]
        %v574 = vld [vmem:[%s199 + $0x40] sm:$0xff]
        %v575 = vld [vmem:[%s199 + $0x48] sm:$0xff]
        %v576 = vld [vmem:[%s199 + $0x50] sm:$0xff]
        %v577 = vld [vmem:[%s199 + $0x58] sm:$0xff]
        %v578 = vld [vmem:[%s199 + $0x60] sm:$0xff]
        %v579 = vld [vmem:[%s199 + $0x68] sm:$0xff]
        %v580 = vld [vmem:[%s199 + $0x70] sm:$0xff]
        %v581 = vld [vmem:[%s199 + $0x78] sm:$0xff]
        %582 = vmatprep.subr.mxu0 0.0
        %583 = vmatpush1.msra.mxu0 %v517
        %584 = vmatprep.subr.mxu0 0.0
        %585 = vmatpush1.msra.mxu0 %v516
        %586 = vmatprep.subr.mxu0 0.0
        %587 = vmatpush1.msra.mxu0 %v515
        %588 = vmatprep.subr.mxu0 0.0
        %589 = vmatpush1.msra.mxu0 %v514
        %590 = vmatprep.subr.mxu0 0.0
        %591 = vmatpush1.msra.mxu0 %v513
        %592 = vmatprep.subr.mxu0 0.0
        %593 = vmatpush1.msra.mxu0 %v512
        %594 = vmatprep.subr.mxu0 0.0
        %595 = vmatpush1.msra.mxu0 %v511
        %596 = vmatprep.subr.mxu0 0.0
        %597 = vmatpush1.msra.mxu0 %v510
        %598 = vmatprep.subr.mxu0 0.0
        %599 = vmatpush1.msra.mxu0 %v509
        %600 = vmatprep.subr.mxu0 0.0
        %601 = vmatpush1.msra.mxu0 %v508
        %602 = vmatprep.subr.mxu0 0.0
        %603 = vmatpush1.msra.mxu0 %v507
        %604 = vmatprep.subr.mxu0 0.0
        %605 = vmatpush1.msra.mxu0 %v506
        %606 = vmatprep.subr.mxu0 0.0
        %607 = vmatpush1.msra.mxu0 %v505
        %608 = vmatprep.subr.mxu0 0.0
        %609 = vmatpush1.msra.mxu0 %v504
        %610 = vmatprep.subr.mxu0 0.0
        %611 = vmatpush1.msra.mxu0 %v503
        %612 = vmatprep.subr.mxu0 0.0
        %613 = vmatpush1.msra.mxu0 %v502
        %614 = vmatprep.subr.mxu0 0.0
        %615 = vmatpush2.msra.mxu0 %v533
        %616 = vmatprep.subr.mxu0 0.0
        %617 = vmatpush2.msra.mxu0 %v532
        %618 = vmatprep.subr.mxu0 0.0
        %619 = vmatpush2.msra.mxu0 %v531
        %620 = vmatprep.subr.mxu0 0.0
        %621 = vmatpush2.msra.mxu0 %v530
        %622 = vmatprep.subr.mxu0 0.0
        %623 = vmatpush2.msra.mxu0 %v529
        %624 = vmatprep.subr.mxu0 0.0
        %625 = vmatpush2.msra.mxu0 %v528
        %626 = vmatprep.subr.mxu0 0.0
        %627 = vmatpush2.msra.mxu0 %v527
        %628 = vmatprep.subr.mxu0 0.0
        %629 = vmatpush2.msra.mxu0 %v526
        %630 = vmatprep.subr.mxu0 0.0
        %631 = vmatpush2.msra.mxu0 %v525
        %632 = vmatprep.subr.mxu0 0.0
        %633 = vmatpush2.msra.mxu0 %v524
        %634 = vmatprep.subr.mxu0 0.0
        %635 = vmatpush2.msra.mxu0 %v523
        %636 = vmatprep.subr.mxu0 0.0
        %637 = vmatpush2.msra.mxu0 %v522
        %638 = vmatprep.subr.mxu0 0.0
        %639 = vmatpush2.msra.mxu0 %v521
        %640 = vmatprep.subr.mxu0 0.0
        %641 = vmatpush2.msra.mxu0 %v520
        %642 = vmatprep.subr.mxu0 0.0
        %643 = vmatpush2.msra.mxu0 %v519
        %644 = vmatprep.subr.mxu0 0.0
        %645 = vmatpush2.msra.mxu0 %v518
        %646 = vmatprep.mubr.f32.mxu0 %v439
        %647 = vmatmul.mubr.f32.gmra.mxu0 %v438
        %v648 = vpop.f32.mrf.mxu0
        %v649 = vadd.f32 %v566, %v648
        %v650 = vpop.f32.mrf.mxu0
        %651 = vmatprep.mubr.f32.mxu0 %v443
        %652 = vmatmul.mubr.f32.gmra.mxu0 %v442
        %v653 = vpop.f32.mrf.mxu0
        %v654 = vadd.f32 %v567, %v653
        %v655 = vpop.f32.mrf.mxu0
        %656 = vmatprep.mubr.f32.mxu0 %v447
        %657 = vmatmul.mubr.f32.gmra.mxu0 %v446
        %v658 = vpop.f32.mrf.mxu0
        %v659 = vadd.f32 %v568, %v658
        %v660 = vpop.f32.mrf.mxu0
        %661 = vmatprep.mubr.f32.mxu0 %v451
        %662 = vmatmul.mubr.f32.gmra.mxu0 %v450
        %v663 = vpop.f32.mrf.mxu0
        %v664 = vadd.f32 %v569, %v663
        %v665 = vpop.f32.mrf.mxu0
        %666 = vmatprep.mubr.f32.mxu0 %v455
        %667 = vmatmul.mubr.f32.gmra.mxu0 %v454
        %v668 = vpop.f32.mrf.mxu0
        %v669 = vadd.f32 %v570, %v668
        %v670 = vpop.f32.mrf.mxu0
        %671 = vmatprep.mubr.f32.mxu0 %v459
        %672 = vmatmul.mubr.f32.gmra.mxu0 %v458
        %v673 = vpop.f32.mrf.mxu0
        %v674 = vadd.f32 %v571, %v673
        %v675 = vpop.f32.mrf.mxu0
        %676 = vmatprep.mubr.f32.mxu0 %v463
        %677 = vmatmul.mubr.f32.gmra.mxu0 %v462
        %v678 = vpop.f32.mrf.mxu0
        %v679 = vadd.f32 %v572, %v678
        %v680 = vpop.f32.mrf.mxu0
        %681 = vmatprep.mubr.f32.mxu0 %v467
        %682 = vmatmul.mubr.f32.gmra.mxu0 %v466
        %v683 = vpop.f32.mrf.mxu0
        %v684 = vadd.f32 %v573, %v683
        %v685 = vpop.f32.mrf.mxu0
        %686 = vmatprep.mubr.f32.mxu0 %v471
        %687 = vmatmul.mubr.f32.gmra.mxu0 %v470
        %v688 = vpop.f32.mrf.mxu0
        %v689 = vadd.f32 %v574, %v688
        %v690 = vpop.f32.mrf.mxu0
        %691 = vmatprep.mubr.f32.mxu0 %v475
        %692 = vmatmul.mubr.f32.gmra.mxu0 %v474
        %v693 = vpop.f32.mrf.mxu0
        %v694 = vadd.f32 %v575, %v693
        %v695 = vpop.f32.mrf.mxu0
        %696 = vmatprep.mubr.f32.mxu0 %v479
        %697 = vmatmul.mubr.f32.gmra.mxu0 %v478
        %v698 = vpop.f32.mrf.mxu0
        %v699 = vadd.f32 %v576, %v698
        %v700 = vpop.f32.mrf.mxu0
        %701 = vmatprep.mubr.f32.mxu0 %v483
        %702 = vmatmul.mubr.f32.gmra.mxu0 %v482
        %v703 = vpop.f32.mrf.mxu0
        %v704 = vadd.f32 %v577, %v703
        %v705 = vpop.f32.mrf.mxu0
        %706 = vmatprep.mubr.f32.mxu0 %v487
        %707 = vmatmul.mubr.f32.gmra.mxu0 %v486
        %v708 = vpop.f32.mrf.mxu0
        %v709 = vadd.f32 %v578, %v708
        %v710 = vpop.f32.mrf.mxu0
        %711 = vmatprep.mubr.f32.mxu0 %v491
        %712 = vmatmul.mubr.f32.gmra.mxu0 %v490
        %v713 = vpop.f32.mrf.mxu0
        %v714 = vadd.f32 %v579, %v713
        %v715 = vpop.f32.mrf.mxu0
        %716 = vmatprep.mubr.f32.mxu0 %v495
        %717 = vmatmul.mubr.f32.gmra.mxu0 %v494
        %v718 = vpop.f32.mrf.mxu0
        %v719 = vadd.f32 %v580, %v718
        %v720 = vpop.f32.mrf.mxu0
        %721 = vmatprep.mubr.f32.mxu0 %v499
        %722 = vmatmul.mubr.f32.gmra.mxu0 %v498
        %v723 = vpop.f32.mrf.mxu0
        %v724 = vadd.f32 %v581, %v723
        %v725 = vpop.f32.mrf.mxu0
        %726 = vdwg.mxu0
        %727 = vmatprep.subr.mxu0 0.0
        %728 = vmatpush1.msra.mxu0 %v549
        %729 = vmatprep.subr.mxu0 0.0
        %730 = vmatpush1.msra.mxu0 %v548
        %731 = vmatprep.subr.mxu0 0.0
        %732 = vmatpush1.msra.mxu0 %v547
        %733 = vmatprep.subr.mxu0 0.0
        %734 = vmatpush1.msra.mxu0 %v546
        %735 = vmatprep.subr.mxu0 0.0
        %736 = vmatpush1.msra.mxu0 %v545
        %737 = vmatprep.subr.mxu0 0.0
        %738 = vmatpush1.msra.mxu0 %v544
        %739 = vmatprep.subr.mxu0 0.0
        %740 = vmatpush1.msra.mxu0 %v543
        %741 = vmatprep.subr.mxu0 0.0
        %742 = vmatpush1.msra.mxu0 %v542
        %743 = vmatprep.subr.mxu0 0.0
        %744 = vmatpush1.msra.mxu0 %v541
        %745 = vmatprep.subr.mxu0 0.0
        %746 = vmatpush1.msra.mxu0 %v540
        %747 = vmatprep.subr.mxu0 0.0
        %748 = vmatpush1.msra.mxu0 %v539
        %749 = vmatprep.subr.mxu0 0.0
        %750 = vmatpush1.msra.mxu0 %v538
        %751 = vmatprep.subr.mxu0 0.0
        %752 = vmatpush1.msra.mxu0 %v537
        %753 = vmatprep.subr.mxu0 0.0
        %754 = vmatpush1.msra.mxu0 %v536
        %755 = vmatprep.subr.mxu0 0.0
        %756 = vmatpush1.msra.mxu0 %v535
        %757 = vmatprep.subr.mxu0 0.0
        %758 = vmatpush1.msra.mxu0 %v534
        %759 = vmatprep.subr.mxu0 0.0
        %760 = vmatpush2.msra.mxu0 %v565
        %761 = vmatprep.subr.mxu0 0.0
        %762 = vmatpush2.msra.mxu0 %v564
        %763 = vmatprep.subr.mxu0 0.0
        %764 = vmatpush2.msra.mxu0 %v563
        %765 = vmatprep.subr.mxu0 0.0
        %766 = vmatpush2.msra.mxu0 %v562
        %767 = vmatprep.subr.mxu0 0.0
        %768 = vmatpush2.msra.mxu0 %v561
        %769 = vmatprep.subr.mxu0 0.0
        %770 = vmatpush2.msra.mxu0 %v560
        %771 = vmatprep.subr.mxu0 0.0
        %772 = vmatpush2.msra.mxu0 %v559
        %773 = vmatprep.subr.mxu0 0.0
        %774 = vmatpush2.msra.mxu0 %v558
        %775 = vmatprep.subr.mxu0 0.0
        %776 = vmatpush2.msra.mxu0 %v557
        %777 = vmatprep.subr.mxu0 0.0
        %778 = vmatpush2.msra.mxu0 %v556
        %779 = vmatprep.subr.mxu0 0.0
        %780 = vmatpush2.msra.mxu0 %v555
        %781 = vmatprep.subr.mxu0 0.0
        %782 = vmatpush2.msra.mxu0 %v554
        %783 = vmatprep.subr.mxu0 0.0
        %784 = vmatpush2.msra.mxu0 %v553
        %785 = vmatprep.subr.mxu0 0.0
        %786 = vmatpush2.msra.mxu0 %v552
        %787 = vmatprep.subr.mxu0 0.0
        %788 = vmatpush2.msra.mxu0 %v551
        %789 = vmatprep.subr.mxu0 0.0
        %790 = vmatpush2.msra.mxu0 %v550
        %791 = vmatprep.mubr.f32.mxu0 %v441
        %792 = vmatmul.mubr.f32.gmra.mxu0 %v440
        %v793 = vpop.f32.mrf.mxu0
        %v794 = vadd.f32 %v649, %v793
        %v795 = vpop.f32.mrf.mxu0
        %796 = vmatprep.mubr.f32.mxu0 %v445
        %797 = vmatmul.mubr.f32.gmra.mxu0 %v444
        %v798 = vpop.f32.mrf.mxu0
        %v799 = vadd.f32 %v654, %v798
        %v800 = vpop.f32.mrf.mxu0
        %801 = vmatprep.mubr.f32.mxu0 %v449
        %802 = vmatmul.mubr.f32.gmra.mxu0 %v448
        %v803 = vpop.f32.mrf.mxu0
        %v804 = vadd.f32 %v659, %v803
        %v805 = vpop.f32.mrf.mxu0
        %806 = vmatprep.mubr.f32.mxu0 %v453
        %807 = vmatmul.mubr.f32.gmra.mxu0 %v452
        %v808 = vpop.f32.mrf.mxu0
        %v809 = vadd.f32 %v664, %v808
        %v810 = vpop.f32.mrf.mxu0
        %811 = vmatprep.mubr.f32.mxu0 %v457
        %812 = vmatmul.mubr.f32.gmra.mxu0 %v456
        %v813 = vpop.f32.mrf.mxu0
        %v814 = vadd.f32 %v669, %v813
        %v815 = vpop.f32.mrf.mxu0
        %816 = vmatprep.mubr.f32.mxu0 %v461
        %817 = vmatmul.mubr.f32.gmra.mxu0 %v460
        %v818 = vpop.f32.mrf.mxu0
        %v819 = vadd.f32 %v674, %v818
        %v820 = vpop.f32.mrf.mxu0
        %821 = vmatprep.mubr.f32.mxu0 %v465
        %822 = vmatmul.mubr.f32.gmra.mxu0 %v464
        %v823 = vpop.f32.mrf.mxu0
        %v824 = vadd.f32 %v679, %v823
        %v825 = vpop.f32.mrf.mxu0
        %826 = vmatprep.mubr.f32.mxu0 %v469
        %827 = vmatmul.mubr.f32.gmra.mxu0 %v468
        %v828 = vpop.f32.mrf.mxu0
        %v829 = vadd.f32 %v684, %v828
        %v830 = vpop.f32.mrf.mxu0
        %831 = vmatprep.mubr.f32.mxu0 %v473
        %832 = vmatmul.mubr.f32.gmra.mxu0 %v472
        %v833 = vpop.f32.mrf.mxu0
        %v834 = vadd.f32 %v689, %v833
        %v835 = vpop.f32.mrf.mxu0
        %836 = vmatprep.mubr.f32.mxu0 %v477
        %837 = vmatmul.mubr.f32.gmra.mxu0 %v476
        %v838 = vpop.f32.mrf.mxu0
        %v839 = vadd.f32 %v694, %v838
        %v840 = vpop.f32.mrf.mxu0
        %841 = vmatprep.mubr.f32.mxu0 %v481
        %842 = vmatmul.mubr.f32.gmra.mxu0 %v480
        %v843 = vpop.f32.mrf.mxu0
        %v844 = vadd.f32 %v699, %v843
        %v845 = vpop.f32.mrf.mxu0
        %846 = vmatprep.mubr.f32.mxu0 %v485
        %847 = vmatmul.mubr.f32.gmra.mxu0 %v484
        %v848 = vpop.f32.mrf.mxu0
        %v849 = vadd.f32 %v704, %v848
        %v850 = vpop.f32.mrf.mxu0
        %851 = vmatprep.mubr.f32.mxu0 %v489
        %852 = vmatmul.mubr.f32.gmra.mxu0 %v488
        %v853 = vpop.f32.mrf.mxu0
        %v854 = vadd.f32 %v709, %v853
        %v855 = vpop.f32.mrf.mxu0
        %856 = vmatprep.mubr.f32.mxu0 %v493
        %857 = vmatmul.mubr.f32.gmra.mxu0 %v492
        %v858 = vpop.f32.mrf.mxu0
        %v859 = vadd.f32 %v714, %v858
        %v860 = vpop.f32.mrf.mxu0
        %861 = vmatprep.mubr.f32.mxu0 %v497
        %862 = vmatmul.mubr.f32.gmra.mxu0 %v496
        %v863 = vpop.f32.mrf.mxu0
        %v864 = vadd.f32 %v719, %v863
        %v865 = vpop.f32.mrf.mxu0
        %866 = vmatprep.mubr.f32.mxu0 %v501
        %867 = vmatmul.mubr.f32.gmra.mxu0 %v500
        %v868 = vpop.f32.mrf.mxu0
        %v869 = vadd.f32 %v724, %v868
        %v870 = vpop.f32.mrf.mxu0
        %871 = vdwg.mxu0
        %872 = vst [vmem:[%s228] sm:$0xff] %v794
        %873 = vst [vmem:[%s228 + $0x8] sm:$0xff] %v799
        %874 = vst [vmem:[%s228 + $0x10] sm:$0xff] %v804
        %875 = vst [vmem:[%s228 + $0x18] sm:$0xff] %v809
        %876 = vst [vmem:[%s228 + $0x20] sm:$0xff] %v814
        %877 = vst [vmem:[%s228 + $0x28] sm:$0xff] %v819
        %878 = vst [vmem:[%s228 + $0x30] sm:$0xff] %v824
        %879 = vst [vmem:[%s228 + $0x38] sm:$0xff] %v829
        %880 = vst [vmem:[%s228 + $0x40] sm:$0xff] %v834
        %881 = vst [vmem:[%s228 + $0x48] sm:$0xff] %v839
        %882 = vst [vmem:[%s228 + $0x50] sm:$0xff] %v844
        %883 = vst [vmem:[%s228 + $0x58] sm:$0xff] %v849
        %884 = vst [vmem:[%s228 + $0x60] sm:$0xff] %v854
        %885 = vst [vmem:[%s228 + $0x68] sm:$0xff] %v859
        %886 = vst [vmem:[%s228 + $0x70] sm:$0xff] %v864
        %887 = vst [vmem:[%s228 + $0x78] sm:$0xff] %v869
        %s888 = sand.u32 %s119, 1
        %s889 = scalar_lea.sflag [#allocation4], %s888
        %s890 = sand.u32 %s119, 1
        %s891 = smul.addr %s890, 128
        %s892 = scalar_lea.vmem [#allocation5], %s891
        // Predicated region
        $region37: #{tpu_custom_call.1} parent=31 // pred_check
          %p893 = pneg %p129
        $region38: #{tpu_custom_call.1} parent=31 // pred_check_branch
          %895 = sbr.rel (%p893) target = $region40
        $region39: #{tpu_custom_call.1} parent=31 // pred_region
          %s896 = smul.u32 16, %s24
          %s898 = ssub.s32 2048, 2048
          %899 = vsyncadd %s889, %s898
          %s900 = smul.addr %s25, 32
          %s901 = sadd.s32 %s896, %s900
          %s902 = smul.addr %s901, 128
          %s903 = scalar_lea.hbm %s3, %s902
          %s904 = sshll.u32 %s892, 4
          %s905 = int_to_ptr.vmem [resolvable:$true] %s904
          %910 = dma.vmem_to_hbm [thread:$0]  %s905, 2048, %s903, %s889, 128, 128, 8
        $region40: #{tpu_custom_call.1} parent=31 // pred_fallthru
          _
      $region32: #{tpu_custom_call.1} parent=5 // pred_fallthru
        _
      %p911 = scmp.le.s32.totalorder 2, %s15
      // Predicated region
      $region41: #{tpu_custom_call.1} parent=5 // pred_check
        %p912 = pneg %p911
      $region42: #{tpu_custom_call.1} parent=5 // pred_check_branch
        %914 = sbr.rel (%p912) target = $region44
      $region43: #{tpu_custom_call.1} parent=5 // pred_region
        %s915 = ssub.s32 %s15, 2
        // Predicated region
        $region45: #{tpu_custom_call.1} parent=43 // pred_check
          %p916 = pneg %p135
        $region46: #{tpu_custom_call.1} parent=43 // pred_check_branch
          %918 = sbr.rel (%p916) target = $region48
        $region47: #{tpu_custom_call.1} parent=43 // pred_region
          %s919 = sand.u32 %s120, 1
          %s920 = scalar_lea.sflag [#allocation4], %s919
          %s921 = sand.u32 %s120, 1
          %s922 = smul.addr %s921, 128
          %s923 = scalar_lea.vmem [#allocation5], %s922
          %924 = dma.done %s920, 2048
        $region48: #{tpu_custom_call.1} parent=43 // pred_fallthru
          _
      $region44: #{tpu_custom_call.1} parent=5 // pred_fallthru
        _
    $region6: #{tpu_custom_call.1} parent=1 // loop_footer
      %s19 = sadd.s32 1, %s15
    $region7: #{tpu_custom_call.1} parent=1 // loop_footer_branch
      %14 = sbr.rel target = $region3
    $region8: #{tpu_custom_call.1} parent=1 // loop_exit
      _
    %925 = vsyncpa [#allocation3], 1
    %s926 = scalar_lea.sflag [#allocation3], 1
    %927 = vsyncpa %s926, 1
    %928 = vsyncpa [#allocation4], 1
    %s929 = scalar_lea.sflag [#allocation4], 1
    %930 = vsyncpa %s929, 1

</llo_original>
